<compile_context>
chip_gen: v7x
topology: tpu7x:2x2x1
jax: 0.10.0
libtpu: 0.0.40
codegen_flags: <defaults>
</compile_context>

<pallas_src>
import functools

import jax
import jax.numpy as jnp
from jax.experimental import pallas as pl
from jax.experimental.pallas import tpu as pltpu


# --------------------------------------------------------------------------- #
# Helpers
# --------------------------------------------------------------------------- #
def _gelu_tanh(x):
    # BLOOM / CUTLASS-epilogue tanh approximation of GELU.
    c = 0.7978845608028654  # sqrt(2/pi)
    return 0.5 * x * (1.0 + jnp.tanh(c * (x + 0.044715 * x * x * x)))


def _round_up(a, b):
    return ((a + b - 1) // b) * b


def _device_kind():
    try:
        return jax.devices()[0].device_kind.lower()
    except Exception:
        return ""


def _is_v7x(kind):
    return ("v7" in kind) or ("7x" in kind)


def _vmem_capacity_bytes(kind):
    try:
        cap = getattr(pltpu.get_tpu_info(), "vmem_capacity_bytes", None)
        if cap:
            return int(cap)
    except Exception:
        pass
    # Conservative fallback per generation.
    return (64 if _is_v7x(kind) else 128) * 1024 * 1024


def _pick_tn4(H4, target):
    """Largest divisor of H4 that is a multiple of 128 and <= target (else H4)."""
    if H4 <= target:
        return H4
    best = None
    d = 128
    while d <= min(target, H4):
        if H4 % d == 0:
            best = d
        d += 128
    return best if best is not None else H4


def _shrink_tn4(H4, tn4):
    if tn4 <= 128:
        return None
    cand = _pick_tn4(H4, tn4 - 128)
    return cand if cand < tn4 else None


def _select_tiles(M, H, H4, *, tm, tn4, is_v7x, int8_mxu, inv_bufs, acc_bytes, budget):
    """Pick (tm, tn4) per generation, then shrink until the VMEM footprint fits."""
    if tm is None:
        # v7x: smaller tm (64 MiB VMEM); v5e/v6e: large tm raises arithmetic
        # intensity on weight streaming (HBM-bound at tm=256 on v6e).
        tm = 128 if is_v7x else (512 if H <= 4096 else 256)
    tm = max(32, _round_up(tm, 32))          # int8 sublane packing
    tm = min(tm, _round_up(M, 32))
    if is_v7x and M > 32:
        # Keep >= 2 i-steps so both v7x TensorCores get work on decode shapes.
        tm = min(tm, _round_up(-(-M // 2), 32))

    target_tn4 = tn4 if tn4 is not None else (1024 if is_v7x else 2048)
    tn4 = _pick_tn4(H4, max(128, target_tn4))

    def footprint(tm_, tn4_):
        fp = (
            tm_ * H * 1 * inv_bufs        # x tile (int8)
            + tm_ * H * 4 * inv_bufs      # residual tile (f32)
            + H * 4 * inv_bufs            # b2 (f32)
            + H * tn4_ * 1 * 2            # W1^T slab (int8), double-buffered over j
            + tn4_ * 4 * 2                # folded fc1 bias slab (f32)
            + tn4_ * H * 1 * 2            # W2^T slab (int8), double-buffered over j
            + tm_ * H * 4 * 2             # output tile (f32), double-buffered writeback
            + tm_ * H * acc_bytes         # fc2 accumulator scratch
            + tm_ * tn4_ * 4              # fc1 / GELU workspace
        )
        if not int8_mxu:
            # bf16 copies of the int8 operands materialised for the v7x MXU.
            fp += 2 * (tm_ * H + H * tn4_ + tm_ * tn4_ + tn4_ * H)
        return fp

    while footprint(tm, tn4) > budget:
        if tm > 128:
            tm = max(32, ((tm // 2) // 32) * 32)
            continue
        s = _shrink_tn4(H4, tn4)
        if s is not None and tn4 > 512:
            tn4 = s
            continue
        if tm > 32:
            tm = max(32, ((tm // 2) // 32) * 32)
            continue
        if s is not None:
            tn4 = s
            continue
        break  # smallest tiles reached; let the compiler do its best
    return tm, tn4, footprint(tm, tn4)


# --------------------------------------------------------------------------- #
# One-time weight preparation (call at weight-load time, NOT per forward call)
# --------------------------------------------------------------------------- #
def prepare_int8_bloom_mlp_params(params):
    """Pre-transpose the int8 weights and pre-fold the fc1 bias, once."""
    H4, H = params["w1"].shape
    w1t = jnp.asarray(params["w1"]).T                        # (H, 4H) int8
    w2t = jnp.asarray(params["w2"]).T                        # (4H, H) int8
    b1f = (float(params["b1_scale"])
           * jnp.asarray(params["b1"], jnp.float32)).reshape(1, H4)
    b2 = jnp.asarray(params["b2"], jnp.float32).reshape(1, H)
    return {
        "w1t": jax.block_until_ready(w1t),
        "w2t": jax.block_until_ready(w2t),
        "b1f": jax.block_until_ready(b1f),
        "b2": jax.block_until_ready(b2),
        "a1": float(params["a1"]),
        "a2": float(params["a2"]),
    }


# --------------------------------------------------------------------------- #
# Kernel
# --------------------------------------------------------------------------- #
def _int8_bloom_mlp_kernel(
    x_ref,      # (tm, H)    int8   quantized hidden_states tile (j-invariant)
    w1t_ref,    # (H, tn4)   int8   fc1 weight slab (pre-transposed)
    b1_ref,     # (1, tn4)   f32    fc1 bias slab, pre-folded b1_scale * b1
    w2t_ref,    # (tn4, H)   int8   fc2 weight slab (pre-transposed)
    b2_ref,     # (1, H)     f32    fc2 bias
    res_ref,    # (tm, H)    f32    residual tile (j-invariant)
    out_ref,    # (tm, H)    f32    output tile
    acc_ref,    # (tm, H)    i32/f32 fc2 accumulator (resident across the 4H axis)
    *,
    a1, a2, int8_mxu, bf16_epilogue,
):
    j = pl.program_id(1)

    # ---- fc1 for this 4H slab (contraction over the full H) ----
    if int8_mxu:
        # Native int8 x int8 -> int32 on the v5e/v6e MXU (exact accumulation).
        acc1 = jnp.dot(x_ref[...], w1t_ref[...],
                       preferred_element_type=jnp.int32).astype(jnp.float32)
    else:
        # v7x: no integer MXU mode -> bf16 operands (int8 exact in bf16), f32 acc.
        acc1 = jnp.dot(x_ref[...].astype(jnp.bfloat16),
                       w1t_ref[...].astype(jnp.bfloat16),
                       preferred_element_type=jnp.float32)

    y1 = a1 * acc1 + b1_ref[...]
    if bf16_epilogue:
        # Optional packed-bf16 epilogue (v6e/v7x VALU); may flip requant ties by 1 LSB.
        y1 = y1.astype(jnp.bfloat16)
    g = _gelu_tanh(y1)
    # TODO(synk): jnp.round is round-half-to-even; CUTLASS float->int ties may differ by 1 LSB.
    q1f = jnp.clip(jnp.round(g), -128.0, 127.0)

    # ---- partial fc2 for this slab, accumulated across slabs ----
    if int8_mxu:
        p = jnp.dot(q1f.astype(jnp.int8), w2t_ref[...],
                    preferred_element_type=jnp.int32)
    else:
        p = jnp.dot(q1f.astype(jnp.bfloat16), w2t_ref[...].astype(jnp.bfloat16),
                    preferred_element_type=jnp.float32)

    @pl.when(j == 0)
    def _():
        acc_ref[...] = p            # direct store: no zero-init + RMW on the first slab

    @pl.when(j > 0)
    def _():
        acc_ref[...] += p

    @pl.when(j == pl.num_programs(1) - 1)
    def _():
        out_ref[...] = (
            a2 * acc_ref[...].astype(jnp.float32) + b2_ref[...] + res_ref[...]
        )


# --------------------------------------------------------------------------- #
# Wrapper
# --------------------------------------------------------------------------- #
def int8_bloom_mlp(hidden_states_i8, residual_f32, prepared, *, tm=None, tn4=None,
                   bf16_epilogue=False):
    """hidden_states_i8: (B,S,H) int8; residual_f32: (B,S,H) f32 -> (B,S,H) f32.

    `prepared` comes from prepare_int8_bloom_mlp_params() (one-time weight prep).
    """
    B, S, H = hidden_states_i8.shape
    H4 = prepared["w1t"].shape[1]
    M = B * S

    kind = _device_kind()
    is_v7x = _is_v7x(kind)
    int8_mxu = not is_v7x                    # v7x MXU has no integer mode
    acc_dtype = jnp.int32 if int8_mxu else jnp.float32
    acc_bytes = 4

    can_single_buffer = hasattr(pl, "Buffered")
    inv_bufs = 1 if can_single_buffer else 2

    vmem_cap = _vmem_capacity_bytes(kind)
    budget = int(vmem_cap * 0.8)             # leave headroom for compiler scratch

    tm, tn4, footprint = _select_tiles(
        M, H, H4, tm=tm, tn4=tn4, is_v7x=is_v7x, int8_mxu=int8_mxu,
        inv_bufs=inv_bufs, acc_bytes=acc_bytes, budget=budget)
    vmem_limit = min(vmem_cap, max(32 * 1024 * 1024, footprint + 8 * 1024 * 1024))

    M_pad = _round_up(M, tm)
    x = hidden_states_i8.reshape(M, H)
    res = residual_f32.reshape(M, H)
    if M_pad != M:
        pad = M_pad - M
        x = jnp.pad(x, ((0, pad), (0, 0)))   # zero rows; sliced off below
        res = jnp.pad(res, ((0, pad), (0, 0)))

    kernel = functools.partial(
        _int8_bloom_mlp_kernel,
        a1=prepared["a1"], a2=prepared["a2"],
        int8_mxu=int8_mxu, bf16_epilogue=bf16_epilogue,
    )

    def build(single_buffer):
        def spec(shape, index_map, invariant=False):
            if invariant and single_buffer:
                # j-invariant operand: second pipeline buffer is pure VMEM waste.
                return pl.BlockSpec(shape, index_map, pipeline_mode=pl.Buffered(1))
            return pl.BlockSpec(shape, index_map)

        grid_spec = pltpu.PrefetchScalarGridSpec(
            num_scalar_prefetch=0,
            grid=(M_pad // tm, H4 // tn4),
            in_specs=[
                spec((tm, H), lambda i, j: (i, 0), invariant=True),   # x tile
                spec((H, tn4), lambda i, j: (0, j)),                  # W1^T slab
                spec((1, tn4), lambda i, j: (0, j)),                  # folded b1 slab
                spec((tn4, H), lambda i, j: (j, 0)),                  # W2^T slab
                spec((1, H), lambda i, j: (0, 0), invariant=True),    # b2
                spec((tm, H), lambda i, j: (i, 0), invariant=True),   # residual tile
            ],
            out_specs=pl.BlockSpec((tm, H), lambda i, j: (i, 0)),     # keep 2 bufs: overlap writeback
            scratch_shapes=[pltpu.VMEM((tm, H), acc_dtype)],
        )
        return pl.pallas_call(
            kernel,
            out_shape=jax.ShapeDtypeStruct((M_pad, H), jnp.float32),
            grid_spec=grid_spec,
            compiler_params=pltpu.CompilerParams(
                dimension_semantics=("parallel", "arbitrary"),
                vmem_limit_bytes=vmem_limit,
            ),
        )

    args = (x, prepared["w1t"], prepared["b1f"], prepared["w2t"], prepared["b2"], res)

    if can_single_buffer:
        try:
            out = jax.block_until_ready(build(True)(*args))
            return out[:M].reshape(B, S, H)
        except Exception:
            # pipeline_mode=pl.Buffered(1) unsupported on this jax build; fall back.
            pass
    out = build(False)(*args)
    return out[:M].reshape(B, S, H)


# --------------------------------------------------------------------------- #
# Pure-JAX reference
# --------------------------------------------------------------------------- #
def _reference(hidden_states_i8, residual_f32, params):
    x = hidden_states_i8.astype(jnp.float32)
    acc1 = jnp.einsum("bsh,oh->bso", x, params["w1"].astype(jnp.float32))
    y1 = params["a1"] * acc1 + params["b1_scale"] * params["b1"].astype(jnp.float32)
    q1 = jnp.clip(jnp.round(_gelu_tanh(y1)), -128.0, 127.0)
    acc2 = jnp.einsum("bso,ho->bsh", q1, params["w2"].astype(jnp.float32))
    return params["a2"] * acc2 + params["b2"] + residual_f32


if __name__ == "__main__":
    B, S, H = 2, 8, 32        # small shapes; hidden=32, intermediate=4*32=128
    H4 = 4 * H

    key = jax.random.PRNGKey(0)
    k_x, k_w1, k_b1, k_w2, k_b2, k_res = jax.random.split(key, 6)

    hidden_states = jax.random.randint(k_x, (B, S, H), -128, 128, dtype=jnp.int32).astype(jnp.int8)
    residual = jax.random.normal(k_res, (B, S, H), dtype=jnp.float32)

    params = {
        # W8A8B8O8LinearGELU(H, 4H): int8 weight (4H, H), int8 bias (4H,), scales a1, b1_scale
        "w1": jax.random.randint(k_w1, (H4, H), -128, 128, dtype=jnp.int32).astype(jnp.int8),
        "b1": jax.random.randint(k_b1, (H4,), -128, 128, dtype=jnp.int32).astype(jnp.int8),
        "a1": 0.004,        # output-dequant scale alpha
        "b1_scale": 0.05,   # bias scale beta
        # W8A8BFP32OFP32Linear(4H, H): int8 weight (H, 4H), fp32 bias (H,), scale a2
        "w2": jax.random.randint(k_w2, (H, H4), -128, 128, dtype=jnp.int32).astype(jnp.int8),
        "b2": (0.01 * jax.random.normal(k_b2, (H,), dtype=jnp.float32)),
        "a2": 0.002,
    }

    # One-time weight prep (transpose + bias fold) -- done at "weight-load time".
    prepared = prepare_int8_bloom_mlp_params(params)

    out = int8_bloom_mlp(hidden_states, residual, prepared)
    out = jax.block_until_ready(out)

    ref = _reference(hidden_states, residual, params)
    assert out.shape == (B, S, H) and out.dtype == jnp.float32
    assert jnp.allclose(out, ref, atol=1e-3, rtol=1e-3), "mismatch vs reference"

    print("KERNEL_OK")
</pallas_src>

<mosaic_0001>
module attributes {stable_mosaic.version = 11 : i64} {
  func.func @_int8_bloom_mlp_kernel(%arg0: i32, %arg1: i32, %arg2: memref<32x32xi8, #tpu.memory_space<vmem>>, %arg3: memref<32x128xi8, #tpu.memory_space<vmem>>, %arg4: memref<1x128xf32, #tpu.memory_space<vmem>>, %arg5: memref<128x32xi8, #tpu.memory_space<vmem>>, %arg6: memref<1x32xf32, #tpu.memory_space<vmem>>, %arg7: memref<32x32xf32, #tpu.memory_space<vmem>>, %arg8: memref<32x32xf32, #tpu.memory_space<vmem>>, %arg9: memref<32x32xi32, #tpu.memory_space<vmem>>) attributes {dimension_semantics = [#tpu.dimension_semantics<parallel>, #tpu.dimension_semantics<arbitrary>], iteration_bounds = array<i64: 1, 1>, scalar_prefetch = 0 : i64, scratch_operands = 1 : i64, tpu.core_type = #tpu.core_type<tc>, window_params = [{pipeline_mode = #tpu.pipeline_mode<synchronous>, transform_indices = @transform_0, window_bounds = array<i64: 32, 32>}, {transform_indices = @transform_1, window_bounds = array<i64: 32, 128>}, {transform_indices = @transform_2, window_bounds = array<i64: 1, 128>}, {transform_indices = @transform_3, window_bounds = array<i64: 128, 32>}, {pipeline_mode = #tpu.pipeline_mode<synchronous>, transform_indices = @transform_4, window_bounds = array<i64: 1, 32>}, {pipeline_mode = #tpu.pipeline_mode<synchronous>, transform_indices = @transform_5, window_bounds = array<i64: 32, 32>}, {transform_indices = @transform_6, window_bounds = array<i64: 32, 32>}]} {
    %c0 = arith.constant 0 : index
    %c0_0 = arith.constant 0 : index
    %0 = vector.load %arg2[%c0, %c0_0] : memref<32x32xi8, #tpu.memory_space<vmem>>, vector<32x32xi8>
    %c0_1 = arith.constant 0 : index
    %c0_2 = arith.constant 0 : index
    %1 = vector.load %arg3[%c0_1, %c0_2] : memref<32x128xi8, #tpu.memory_space<vmem>>, vector<32x128xi8>
    %cst = arith.constant dense<0> : vector<32x128xi32>
    %2 = tpu.matmul %0, %1, %cst {dimension_numbers = #tpu.dot_dimension_numbers<[1], [0], [0], [1], [0, 0, 1, 1], [], []>} : vector<32x32xi8>, vector<32x128xi8>, vector<32x128xi32> -> vector<32x128xi32>
    %3 = arith.sitofp %2 : vector<32x128xi32> to vector<32x128xf32>
    %cst_3 = arith.constant 4.000000e-03 : f32
    %4 = vector.broadcast %cst_3 : f32 to vector<32x128xf32>
    %5 = arith.mulf %4, %3 : vector<32x128xf32>
    %c0_4 = arith.constant 0 : index
    %c0_5 = arith.constant 0 : index
    %6 = vector.load %arg4[%c0_4, %c0_5] : memref<1x128xf32, #tpu.memory_space<vmem>>, vector<1x128xf32>
    %7 = vector.broadcast %6 : vector<1x128xf32> to vector<32x128xf32>
    %8 = arith.addf %5, %7 : vector<32x128xf32>
    %cst_6 = arith.constant 5.000000e-01 : f32
    %9 = vector.broadcast %cst_6 : f32 to vector<32x128xf32>
    %10 = arith.mulf %9, %8 : vector<32x128xf32>
    %cst_7 = arith.constant 4.471500e-02 : f32
    %11 = vector.broadcast %cst_7 : f32 to vector<32x128xf32>
    %12 = arith.mulf %11, %8 : vector<32x128xf32>
    %13 = arith.mulf %12, %8 : vector<32x128xf32>
    %14 = arith.mulf %13, %8 : vector<32x128xf32>
    %15 = arith.addf %8, %14 : vector<32x128xf32>
    %cst_8 = arith.constant 0.797884583 : f32
    %16 = vector.broadcast %cst_8 : f32 to vector<32x128xf32>
    %17 = arith.mulf %16, %15 : vector<32x128xf32>
    %18 = math.tanh %17 : vector<32x128xf32>
    %cst_9 = arith.constant 1.000000e+00 : f32
    %19 = vector.broadcast %cst_9 : f32 to vector<32x128xf32>
    %20 = arith.addf %19, %18 : vector<32x128xf32>
    %21 = arith.mulf %10, %20 : vector<32x128xf32>
    %22 = math.roundeven %21 : vector<32x128xf32>
    %cst_10 = arith.constant -1.280000e+02 : f32
    %cst_11 = arith.constant 1.270000e+02 : f32
    %23 = vector.broadcast %cst_10 : f32 to vector<32x128xf32>
    %24 = arith.maximumf %23, %22 : vector<32x128xf32>
    %25 = vector.broadcast %cst_11 : f32 to vector<32x128xf32>
    %26 = arith.minimumf %25, %24 : vector<32x128xf32>
    %27 = arith.fptosi %26 : vector<32x128xf32> to vector<32x128xi8>
    %c0_12 = arith.constant 0 : index
    %c0_13 = arith.constant 0 : index
    %28 = vector.load %arg5[%c0_12, %c0_13] : memref<128x32xi8, #tpu.memory_space<vmem>>, vector<128x32xi8>
    %cst_14 = arith.constant dense<0> : vector<32x32xi32>
    %29 = tpu.matmul %27, %28, %cst_14 {dimension_numbers = #tpu.dot_dimension_numbers<[1], [0], [0], [1], [0, 0, 1, 1], [], []>} : vector<32x128xi8>, vector<128x32xi8>, vector<32x32xi32> -> vector<32x32xi32>
    %c0_i32 = arith.constant 0 : i32
    %30 = arith.cmpi eq, %arg1, %c0_i32 : i32
    %31 = arith.extui %30 : i1 to i32
    %c0_i32_15 = arith.constant 0 : i32
    %32 = arith.cmpi ne, %31, %c0_i32_15 : i32
    scf.if %32 {
      %c0_20 = arith.constant 0 : index
      %c0_21 = arith.constant 0 : index
      %39 = vector.load %arg9[%c0_20, %c0_21] : memref<32x32xi32, #tpu.memory_space<vmem>>, vector<32x32xi32>
      tpu.vector_store %arg9[%c0_20, %c0_21], %29 {strides = array<i32>} : memref<32x32xi32, #tpu.memory_space<vmem>>, vector<32x32xi32>,
    } else {
    }
    %c0_i32_16 = arith.constant 0 : i32
    %33 = arith.cmpi sgt, %arg1, %c0_i32_16 : i32
    %34 = arith.extui %33 : i1 to i32
    %c0_i32_17 = arith.constant 0 : i32
    %35 = arith.cmpi ne, %34, %c0_i32_17 : i32
    scf.if %35 {
      %c0_20 = arith.constant 0 : index
      %c0_21 = arith.constant 0 : index
      %39 = vector.load %arg9[%c0_20, %c0_21] : memref<32x32xi32, #tpu.memory_space<vmem>>, vector<32x32xi32>
      %40 = arith.addi %39, %29 : vector<32x32xi32>
      %c0_22 = arith.constant 0 : index
      %c0_23 = arith.constant 0 : index
      %41 = vector.load %arg9[%c0_22, %c0_23] : memref<32x32xi32, #tpu.memory_space<vmem>>, vector<32x32xi32>
      tpu.vector_store %arg9[%c0_22, %c0_23], %40 {strides = array<i32>} : memref<32x32xi32, #tpu.memory_space<vmem>>, vector<32x32xi32>,
    } else {
    }
    %c0_i32_18 = arith.constant 0 : i32
    %36 = arith.cmpi eq, %arg1, %c0_i32_18 : i32
    %37 = arith.extui %36 : i1 to i32
    %c0_i32_19 = arith.constant 0 : i32
    %38 = arith.cmpi ne, %37, %c0_i32_19 : i32
    scf.if %38 {
      %c0_20 = arith.constant 0 : index
      %c0_21 = arith.constant 0 : index
      %39 = vector.load %arg9[%c0_20, %c0_21] : memref<32x32xi32, #tpu.memory_space<vmem>>, vector<32x32xi32>
      %40 = arith.sitofp %39 : vector<32x32xi32> to vector<32x32xf32>
      %cst_22 = arith.constant 2.000000e-03 : f32
      %41 = vector.broadcast %cst_22 : f32 to vector<32x32xf32>
      %42 = arith.mulf %41, %40 : vector<32x32xf32>
      %c0_23 = arith.constant 0 : index
      %c0_24 = arith.constant 0 : index
      %43 = vector.load %arg6[%c0_23, %c0_24] : memref<1x32xf32, #tpu.memory_space<vmem>>, vector<1x32xf32>
      %44 = vector.broadcast %43 : vector<1x32xf32> to vector<32x32xf32>
      %45 = arith.addf %42, %44 : vector<32x32xf32>
      %c0_25 = arith.constant 0 : index
      %c0_26 = arith.constant 0 : index
      %46 = vector.load %arg7[%c0_25, %c0_26] : memref<32x32xf32, #tpu.memory_space<vmem>>, vector<32x32xf32>
      %47 = arith.addf %45, %46 : vector<32x32xf32>
      %c0_27 = arith.constant 0 : index
      %c0_28 = arith.constant 0 : index
      %48 = vector.load %arg8[%c0_27, %c0_28] : memref<32x32xf32, #tpu.memory_space<vmem>>, vector<32x32xf32>
      tpu.vector_store %arg8[%c0_27, %c0_28], %47 {strides = array<i32>} : memref<32x32xf32, #tpu.memory_space<vmem>>, vector<32x32xf32>,
    } else {
    }
    return
  }
  func.func @transform_0(%arg0: i32, %arg1: i32) -> (i32, i32) {
    %c0_i32 = arith.constant 0 : i32
    %c0_i32_0 = arith.constant 0 : i32
    return %arg0, %c0_i32 : i32, i32
  }
  func.func @transform_1(%arg0: i32, %arg1: i32) -> (i32, i32) {
    %c0_i32 = arith.constant 0 : i32
    %c0_i32_0 = arith.constant 0 : i32
    return %c0_i32, %arg1 : i32, i32
  }
  func.func @transform_2(%arg0: i32, %arg1: i32) -> (i32, i32) {
    %c0_i32 = arith.constant 0 : i32
    %c0_i32_0 = arith.constant 0 : i32
    return %c0_i32, %arg1 : i32, i32
  }
  func.func @transform_3(%arg0: i32, %arg1: i32) -> (i32, i32) {
    %c0_i32 = arith.constant 0 : i32
    %c0_i32_0 = arith.constant 0 : i32
    return %arg1, %c0_i32 : i32, i32
  }
  func.func @transform_4(%arg0: i32, %arg1: i32) -> (i32, i32) {
    %c0_i32 = arith.constant 0 : i32
    %c0_i32_0 = arith.constant 0 : i32
    %c0_i32_1 = arith.constant 0 : i32
    return %c0_i32, %c0_i32_0 : i32, i32
  }
  func.func @transform_5(%arg0: i32, %arg1: i32) -> (i32, i32) {
    %c0_i32 = arith.constant 0 : i32
    %c0_i32_0 = arith.constant 0 : i32
    return %arg0, %c0_i32 : i32, i32
  }
  func.func @transform_6(%arg0: i32, %arg1: i32) -> (i32, i32) {
    %c0_i32 = arith.constant 0 : i32
    %c0_i32_0 = arith.constant 0 : i32
    return %arg0, %c0_i32 : i32, i32
  }
}

module attributes {stable_mosaic.version = 11 : i64} {
  func.func @_int8_bloom_mlp_kernel(%arg0: i32, %arg1: i32, %arg2: memref<32x32xi8, #tpu.memory_space<vmem>>, %arg3: memref<32x128xi8, #tpu.memory_space<vmem>>, %arg4: memref<1x128xf32, #tpu.memory_space<vmem>>, %arg5: memref<128x32xi8, #tpu.memory_space<vmem>>, %arg6: memref<1x32xf32, #tpu.memory_space<vmem>>, %arg7: memref<32x32xf32, #tpu.memory_space<vmem>>, %arg8: memref<32x32xf32, #tpu.memory_space<vmem>>, %arg9: memref<32x32xi32, #tpu.memory_space<vmem>>) attributes {dimension_semantics = [#tpu.dimension_semantics<parallel>, #tpu.dimension_semantics<arbitrary>], iteration_bounds = array<i64: 1, 1>, scalar_prefetch = 0 : i64, scratch_operands = 1 : i64, tpu.core_type = #tpu.core_type<tc>, window_params = [{transform_indices = @transform_0, window_bounds = array<i64: 32, 32>}, {transform_indices = @transform_1, window_bounds = array<i64: 32, 128>}, {transform_indices = @transform_2, window_bounds = array<i64: 1, 128>}, {transform_indices = @transform_3, window_bounds = array<i64: 128, 32>}, {pipeline_mode = #tpu.pipeline_mode<synchronous>, transform_indices = @transform_4, window_bounds = array<i64: 1, 32>}, {transform_indices = @transform_5, window_bounds = array<i64: 32, 32>}, {transform_indices = @transform_6, window_bounds = array<i64: 32, 32>}]} {
    %c0 = arith.constant 0 : index
    %c0_0 = arith.constant 0 : index
    %0 = vector.load %arg2[%c0, %c0_0] : memref<32x32xi8, #tpu.memory_space<vmem>>, vector<32x32xi8>
    %c0_1 = arith.constant 0 : index
    %c0_2 = arith.constant 0 : index
    %1 = vector.load %arg3[%c0_1, %c0_2] : memref<32x128xi8, #tpu.memory_space<vmem>>, vector<32x128xi8>
    %cst = arith.constant dense<0> : vector<32x128xi32>
    %2 = tpu.matmul %0, %1, %cst {dimension_numbers = #tpu.dot_dimension_numbers<[1], [0], [0], [1], [0, 0, 1, 1], [], []>} : vector<32x32xi8>, vector<32x128xi8>, vector<32x128xi32> -> vector<32x128xi32>
    %3 = arith.sitofp %2 : vector<32x128xi32> to vector<32x128xf32>
    %cst_3 = arith.constant 4.000000e-03 : f32
    %4 = vector.broadcast %cst_3 : f32 to vector<32x128xf32>
    %5 = arith.mulf %4, %3 : vector<32x128xf32>
    %c0_4 = arith.constant 0 : index
    %c0_5 = arith.constant 0 : index
    %6 = vector.load %arg4[%c0_4, %c0_5] : memref<1x128xf32, #tpu.memory_space<vmem>>, vector<1x128xf32>
    %7 = vector.broadcast %6 : vector<1x128xf32> to vector<32x128xf32>
    %8 = arith.addf %5, %7 : vector<32x128xf32>
    %cst_6 = arith.constant 5.000000e-01 : f32
    %9 = vector.broadcast %cst_6 : f32 to vector<32x128xf32>
    %10 = arith.mulf %9, %8 : vector<32x128xf32>
    %cst_7 = arith.constant 4.471500e-02 : f32
    %11 = vector.broadcast %cst_7 : f32 to vector<32x128xf32>
    %12 = arith.mulf %11, %8 : vector<32x128xf32>
    %13 = arith.mulf %12, %8 : vector<32x128xf32>
    %14 = arith.mulf %13, %8 : vector<32x128xf32>
    %15 = arith.addf %8, %14 : vector<32x128xf32>
    %cst_8 = arith.constant 0.797884583 : f32
    %16 = vector.broadcast %cst_8 : f32 to vector<32x128xf32>
    %17 = arith.mulf %16, %15 : vector<32x128xf32>
    %18 = math.tanh %17 : vector<32x128xf32>
    %cst_9 = arith.constant 1.000000e+00 : f32
    %19 = vector.broadcast %cst_9 : f32 to vector<32x128xf32>
    %20 = arith.addf %19, %18 : vector<32x128xf32>
    %21 = arith.mulf %10, %20 : vector<32x128xf32>
    %22 = math.roundeven %21 : vector<32x128xf32>
    %cst_10 = arith.constant -1.280000e+02 : f32
    %cst_11 = arith.constant 1.270000e+02 : f32
    %23 = vector.broadcast %cst_10 : f32 to vector<32x128xf32>
    %24 = arith.maximumf %23, %22 : vector<32x128xf32>
    %25 = vector.broadcast %cst_11 : f32 to vector<32x128xf32>
    %26 = arith.minimumf %25, %24 : vector<32x128xf32>
    %27 = arith.fptosi %26 : vector<32x128xf32> to vector<32x128xi8>
    %c0_12 = arith.constant 0 : index
    %c0_13 = arith.constant 0 : index
    %28 = vector.load %arg5[%c0_12, %c0_13] : memref<128x32xi8, #tpu.memory_space<vmem>>, vector<128x32xi8>
    %cst_14 = arith.constant dense<0> : vector<32x32xi32>
    %29 = tpu.matmul %27, %28, %cst_14 {dimension_numbers = #tpu.dot_dimension_numbers<[1], [0], [0], [1], [0, 0, 1, 1], [], []>} : vector<32x128xi8>, vector<128x32xi8>, vector<32x32xi32> -> vector<32x32xi32>
    %c0_i32 = arith.constant 0 : i32
    %30 = arith.cmpi eq, %arg1, %c0_i32 : i32
    %31 = arith.extui %30 : i1 to i32
    %c0_i32_15 = arith.constant 0 : i32
    %32 = arith.cmpi ne, %31, %c0_i32_15 : i32
    scf.if %32 {
      %c0_20 = arith.constant 0 : index
      %c0_21 = arith.constant 0 : index
      %39 = vector.load %arg9[%c0_20, %c0_21] : memref<32x32xi32, #tpu.memory_space<vmem>>, vector<32x32xi32>
      tpu.vector_store %arg9[%c0_20, %c0_21], %29 {strides = array<i32>} : memref<32x32xi32, #tpu.memory_space<vmem>>, vector<32x32xi32>,
    } else {
    }
    %c0_i32_16 = arith.constant 0 : i32
    %33 = arith.cmpi sgt, %arg1, %c0_i32_16 : i32
    %34 = arith.extui %33 : i1 to i32
    %c0_i32_17 = arith.constant 0 : i32
    %35 = arith.cmpi ne, %34, %c0_i32_17 : i32
    scf.if %35 {
      %c0_20 = arith.constant 0 : index
      %c0_21 = arith.constant 0 : index
      %39 = vector.load %arg9[%c0_20, %c0_21] : memref<32x32xi32, #tpu.memory_space<vmem>>, vector<32x32xi32>
      %40 = arith.addi %39, %29 : vector<32x32xi32>
      %c0_22 = arith.constant 0 : index
      %c0_23 = arith.constant 0 : index
      %41 = vector.load %arg9[%c0_22, %c0_23] : memref<32x32xi32, #tpu.memory_space<vmem>>, vector<32x32xi32>
      tpu.vector_store %arg9[%c0_22, %c0_23], %40 {strides = array<i32>} : memref<32x32xi32, #tpu.memory_space<vmem>>, vector<32x32xi32>,
    } else {
    }
    %c0_i32_18 = arith.constant 0 : i32
    %36 = arith.cmpi eq, %arg1, %c0_i32_18 : i32
    %37 = arith.extui %36 : i1 to i32
    %c0_i32_19 = arith.constant 0 : i32
    %38 = arith.cmpi ne, %37, %c0_i32_19 : i32
    scf.if %38 {
      %c0_20 = arith.constant 0 : index
      %c0_21 = arith.constant 0 : index
      %39 = vector.load %arg9[%c0_20, %c0_21] : memref<32x32xi32, #tpu.memory_space<vmem>>, vector<32x32xi32>
      %40 = arith.sitofp %39 : vector<32x32xi32> to vector<32x32xf32>
      %cst_22 = arith.constant 2.000000e-03 : f32
      %41 = vector.broadcast %cst_22 : f32 to vector<32x32xf32>
      %42 = arith.mulf %41, %40 : vector<32x32xf32>
      %c0_23 = arith.constant 0 : index
      %c0_24 = arith.constant 0 : index
      %43 = vector.load %arg6[%c0_23, %c0_24] : memref<1x32xf32, #tpu.memory_space<vmem>>, vector<1x32xf32>
      %44 = vector.broadcast %43 : vector<1x32xf32> to vector<32x32xf32>
      %45 = arith.addf %42, %44 : vector<32x32xf32>
      %c0_25 = arith.constant 0 : index
      %c0_26 = arith.constant 0 : index
      %46 = vector.load %arg7[%c0_25, %c0_26] : memref<32x32xf32, #tpu.memory_space<vmem>>, vector<32x32xf32>
      %47 = arith.addf %45, %46 : vector<32x32xf32>
      %c0_27 = arith.constant 0 : index
      %c0_28 = arith.constant 0 : index
      %48 = vector.load %arg8[%c0_27, %c0_28] : memref<32x32xf32, #tpu.memory_space<vmem>>, vector<32x32xf32>
      tpu.vector_store %arg8[%c0_27, %c0_28], %47 {strides = array<i32>} : memref<32x32xf32, #tpu.memory_space<vmem>>, vector<32x32xf32>,
    } else {
    }
    return
  }
  func.func @transform_0(%arg0: i32, %arg1: i32) -> (i32, i32) {
    %c0_i32 = arith.constant 0 : i32
    %c0_i32_0 = arith.constant 0 : i32
    return %arg0, %c0_i32 : i32, i32
  }
  func.func @transform_1(%arg0: i32, %arg1: i32) -> (i32, i32) {
    %c0_i32 = arith.constant 0 : i32
    %c0_i32_0 = arith.constant 0 : i32
    return %c0_i32, %arg1 : i32, i32
  }
  func.func @transform_2(%arg0: i32, %arg1: i32) -> (i32, i32) {
    %c0_i32 = arith.constant 0 : i32
    %c0_i32_0 = arith.constant 0 : i32
    return %c0_i32, %arg1 : i32, i32
  }
  func.func @transform_3(%arg0: i32, %arg1: i32) -> (i32, i32) {
    %c0_i32 = arith.constant 0 : i32
    %c0_i32_0 = arith.constant 0 : i32
    return %arg1, %c0_i32 : i32, i32
  }
  func.func @transform_4(%arg0: i32, %arg1: i32) -> (i32, i32) {
    %c0_i32 = arith.constant 0 : i32
    %c0_i32_0 = arith.constant 0 : i32
    %c0_i32_1 = arith.constant 0 : i32
    return %c0_i32, %c0_i32_0 : i32, i32
  }
  func.func @transform_5(%arg0: i32, %arg1: i32) -> (i32, i32) {
    %c0_i32 = arith.constant 0 : i32
    %c0_i32_0 = arith.constant 0 : i32
    return %arg0, %c0_i32 : i32, i32
  }
  func.func @transform_6(%arg0: i32, %arg1: i32) -> (i32, i32) {
    %c0_i32 = arith.constant 0 : i32
    %c0_i32_0 = arith.constant 0 : i32
    return %arg0, %c0_i32 : i32, i32
  }
}

</mosaic_0001>

<llo_original>
// kernel: tpu_custom_call.1
$region0: #{tpu_custom_call.1}
  #allocation0 [shape = 'u32[]', space=smem, size = 0x4, offset = 0x4, fixed_abs, tag = 'smem constant byte address 0x4 - core index']
  #allocation1 [shape = 'u32[144,128]{1,0:T(1,128)}', space=vmem, size = 0x12000, scoped, tag = 'internal scratch']
  #allocation2 [shape = 's32[32,32]{1,0:T(8,128)}', space=vmem, size = 0x4000, scoped, tag = 'scratch operand']
  %s0 = inlined_call_operand.vmem [shape: s8[32,32], index: 0, kind: input, shape index: {}]
  %s1 = inlined_call_operand.vmem [shape: s8[32,128], index: 1, kind: input, shape index: {}]
  %s2 = inlined_call_operand.vmem [shape: f32[1,128], index: 2, kind: input, shape index: {}]
  %s3 = inlined_call_operand.vmem [shape: s8[128,32], index: 3, kind: input, shape index: {}]
  %s4 = inlined_call_operand.vmem [shape: f32[1,32], index: 4, kind: input, shape index: {}]
  %s5 = inlined_call_operand.vmem [shape: f32[32,32], index: 5, kind: input, shape index: {}]
  %s6 = inlined_call_operand.hbm [shape: f32[32,32], index: 6, kind: output, shape index: {}]
  %s7 = sld [smem:[#allocation0]]
  $region46: #{tpu_custom_call.1} parent=0
    _
  %s9 = ssub.s32 1, %s7
  %s10 = scalar_select 0, %s9, %s7
  $region1: #{tpu_custom_call.1} parent=0
    #allocation3 [shape = 'u8[16384]{0}', space=vmem, size = 0x4000, scoped, tag = 'output window, operand 0, single buffered']
    #allocation4 [shape = 's32[1]{0}', space=sflag, size = 0x4, scoped, tag = 'scoped memory for tpu_custom_call.1']
    %11 = vsyncpa [#allocation4], 0
    // Predicated region
    $region2: #{tpu_custom_call.1} parent=1 // pred_check
      _
    $region3: #{tpu_custom_call.1} parent=1 // pred_check_branch
      %13 = sbr.rel (0) target = $region5
    $region4: #{tpu_custom_call.1} parent=1 // pred_region
      _
    $region5: #{tpu_custom_call.1} parent=1 // pred_fallthru
      _
    // Predicated region
    $region6: #{tpu_custom_call.1} parent=1 // pred_check
      _
    $region7: #{tpu_custom_call.1} parent=1 // pred_check_branch
      %15 = sbr.rel (0) target = $region9
    $region8: #{tpu_custom_call.1} parent=1 // pred_region
      _
    $region9: #{tpu_custom_call.1} parent=1 // pred_fallthru
      _
    // Predicated region
    $region10: #{tpu_custom_call.1} parent=1 // pred_check
      _
    $region11: #{tpu_custom_call.1} parent=1 // pred_check_branch
      %17 = sbr.rel (0) target = $region13
    $region12: #{tpu_custom_call.1} parent=1 // pred_region
      _
    $region13: #{tpu_custom_call.1} parent=1 // pred_fallthru
      _
    // Predicated region
    $region14: #{tpu_custom_call.1} parent=1 // pred_check
      _
    $region15: #{tpu_custom_call.1} parent=1 // pred_check_branch
      %19 = sbr.rel (0) target = $region17
    $region16: #{tpu_custom_call.1} parent=1 // pred_region
      _
    $region17: #{tpu_custom_call.1} parent=1 // pred_fallthru
      _
    // Predicated region
    $region18: #{tpu_custom_call.1} parent=1 // pred_check
      _
    $region19: #{tpu_custom_call.1} parent=1 // pred_check_branch
      %21 = sbr.rel (0) target = $region21
    $region20: #{tpu_custom_call.1} parent=1 // pred_region
      _
    $region21: #{tpu_custom_call.1} parent=1 // pred_fallthru
      _
    // Predicated region
    $region22: #{tpu_custom_call.1} parent=1 // pred_check
      _
    $region23: #{tpu_custom_call.1} parent=1 // pred_check_branch
      %23 = sbr.rel (0) target = $region25
    $region24: #{tpu_custom_call.1} parent=1 // pred_region
      _
    $region25: #{tpu_custom_call.1} parent=1 // pred_fallthru
      _
    %v25 = vld [vmem:[%s0] sm:$0xff]
    %v26 = vld [vmem:[%s1] sm:$0xff]
    %v27 = vunpack.c.l.s8.bf16 %v25
    %v28 = vunpack.c.h.s8.bf16 %v25
    %v29 = vunpack.c.l.s8.bf16 %v26
    %v30 = vunpack.c.h.s8.bf16 %v26
    %v31 = vcvt.s32.f32 0
    %vm32 = vcmask 261120
    %v34 = vsel %vm32, %v27, 0
    %v37 = vsel %vm32, %v28, 0
    %39 = vmatprep.subr.bf16.mxu0 0
    %40 = vmatpush1.bf16.msra.mxu0 %v29
    %41 = vmatprep.subr.bf16.mxu0 0
    %42 = vmatpush1.bf16.msra.mxu0 %v30
    %43 = vmatprep.subr.bf16.mxu0 0
    %44 = vmatpush1.bf16.msra.mxu0 0
    %45 = vmatprep.subr.bf16.mxu0 0
    %46 = vmatpush1.bf16.msra.mxu0 0
    %47 = vmatprep.subr.bf16.mxu0 0
    %48 = vmatpush1.bf16.msra.mxu0 0
    %49 = vmatprep.subr.bf16.mxu0 0
    %50 = vmatpush1.bf16.msra.mxu0 0
    %51 = vmatprep.subr.bf16.mxu0 0
    %52 = vmatpush1.bf16.msra.mxu0 0
    %53 = vmatprep.subr.bf16.mxu0 0
    %54 = vmatpush1.bf16.msra.mxu0 0
    %55 = vmatprep.subr.bf16.mxu0 0
    %56 = vmatpush1.bf16.msra.mxu0 0
    %57 = vmatprep.subr.bf16.mxu0 0
    %58 = vmatpush1.bf16.msra.mxu0 0
    %59 = vmatprep.subr.bf16.mxu0 0
    %60 = vmatpush1.bf16.msra.mxu0 0
    %61 = vmatprep.subr.bf16.mxu0 0
    %62 = vmatpush1.bf16.msra.mxu0 0
    %63 = vmatprep.subr.bf16.mxu0 0
    %64 = vmatpush1.bf16.msra.mxu0 0
    %65 = vmatprep.subr.bf16.mxu0 0
    %66 = vmatpush1.bf16.msra.mxu0 0
    %67 = vmatprep.subr.bf16.mxu0 0
    %68 = vmatpush1.bf16.msra.mxu0 0
    %69 = vmatprep.subr.bf16.mxu0 0
    %70 = vmatpush1.bf16.msra.mxu0 0
    %71 = vmatprep.mubr.bf16.mxu0 0
    %72 = vmatmul.mubr.bf16.gmra.mrb[0].mxu0 %v34
    %v73 = vpop.f32.mrb[0].mxu0
    %v74 = vadd.f32 %v31, %v73
    %v75 = vpop.f32.mrb[0].mxu0
    %v76 = vpop.f32.mrb[0].mxu0
    %v77 = vadd.f32 %v31, %v76
    %v78 = vpop.f32.mrb[0].mxu0
    %79 = vmatprep.mubr.bf16.mxu0 0
    %80 = vmatmul.mubr.bf16.gmra.mrb[0].mxu0 %v37
    %v81 = vpop.f32.mrb[0].mxu0
    %v82 = vadd.f32 %v31, %v81
    %v83 = vpop.f32.mrb[0].mxu0
    %v84 = vpop.f32.mrb[0].mxu0
    %v85 = vadd.f32 %v31, %v84
    %v86 = vpop.f32.mrb[0].mxu0
    %87 = vdwg.mxu0
    %v88 = vcvt.f32.s32.to.zero.pseudo %v74
    %v89 = vcvt.f32.s32.to.zero.pseudo %v77
    %v90 = vcvt.f32.s32.to.zero.pseudo %v82
    %v91 = vcvt.f32.s32.to.zero.pseudo %v85
    %v92 = vcvt.s32.f32 %v88
    %v93 = vcvt.s32.f32 %v89
    %v94 = vcvt.s32.f32 %v90
    %v95 = vcvt.s32.f32 %v91
    %v96 = vmul.f32 %v92, 0.004
    %v97 = vmul.f32 %v93, 0.004
    %v98 = vmul.f32 %v94, 0.004
    %v99 = vmul.f32 %v95, 0.004
    %v100 = vld [vmem:[%s2] sm:$0x1]
    %v102 = vlaneseq
    %v103 = vshrl.u32 %v102, 7
    %v104 = vsub.s32 0, %v103
    %v105 = vrot.slane %v100, %v104
    %v107 = vadd.f32 %v96, %v105
    %v108 = vadd.f32 %v97, %v105
    %v109 = vadd.f32 %v98, %v105
    %v110 = vadd.f32 %v99, %v105
    %v111 = vmul.f32 %v107, 0.5
    %v112 = vmul.f32 %v108, 0.5
    %v113 = vmul.f32 %v109, 0.5
    %v114 = vmul.f32 %v110, 0.5
    %v115 = vmul.f32 %v107, 0.044715
    %v116 = vmul.f32 %v108, 0.044715
    %v117 = vmul.f32 %v109, 0.044715
    %v118 = vmul.f32 %v110, 0.044715
    %v119 = vmul.f32 %v115, %v107
    %v120 = vmul.f32 %v116, %v108
    %v121 = vmul.f32 %v117, %v109
    %v122 = vmul.f32 %v118, %v110
    %v123 = vmul.f32 %v119, %v107
    %v124 = vmul.f32 %v120, %v108
    %v125 = vmul.f32 %v121, %v109
    %v126 = vmul.f32 %v122, %v110
    %v127 = vadd.f32 %v107, %v123
    %v128 = vadd.f32 %v108, %v124
    %v129 = vadd.f32 %v109, %v125
    %v130 = vadd.f32 %v110, %v126
    %v131 = vmul.f32 %v127, 0.7978846
    %v132 = vmul.f32 %v128, 0.7978846
    %v133 = vmul.f32 %v129, 0.7978846
    %v134 = vmul.f32 %v130, 0.7978846
    %v135 = vtanh.pop %v131
    %v136 = vtanh.pop %v132
    %v137 = vtanh.pop %v133
    %v138 = vtanh.pop %v134
    %v139 = vadd.f32 %v135, 1.0
    %v140 = vadd.f32 %v136, 1.0
    %v141 = vadd.f32 %v137, 1.0
    %v142 = vadd.f32 %v138, 1.0
    %v143 = vmul.f32 %v111, %v139
    %v144 = vmul.f32 %v112, %v140
    %v145 = vmul.f32 %v113, %v141
    %v146 = vmul.f32 %v114, %v142
    %v147 = vround.ne.pseudo %v143
    %v148 = vround.ne.pseudo %v144
    %v149 = vround.ne.pseudo %v145
    %v150 = vround.ne.pseudo %v146
    %v151 = vmax.f32 %v147, -128.0
    %v152 = vmax.f32 %v148, -128.0
    %v153 = vmax.f32 %v149, -128.0
    %v154 = vmax.f32 %v150, -128.0
    %v155 = vmin.f32 %v151, 127.0
    %v156 = vmin.f32 %v152, 127.0
    %v157 = vmin.f32 %v153, 127.0
    %v158 = vmin.f32 %v154, 127.0
    %v159 = vtrunc.f32 %v155
    %v160 = vtrunc.f32 %v156
    %v161 = vtrunc.f32 %v157
    %v162 = vtrunc.f32 %v158
    %v163 = vpack.c.f32.eXmY %v159, %v160, 312
    %v167 = vpack.c.f32.eXmY %v161, %v162, 312
    %v171 = vpack.c.b8 %v167, %v163
    %v173 = vld [vmem:[%s3] sm:$0xff]
    %v174 = vld [vmem:[%s3 + $0x8] sm:$0xff]
    %v175 = vld [vmem:[%s3 + $0x10] sm:$0xff]
    %v176 = vld [vmem:[%s3 + $0x18] sm:$0xff]
    %v177 = vunpack.c.l.s8.bf16 %v171
    %v178 = vunpack.c.h.s8.bf16 %v171
    %v179 = vunpack.c.l.s8.bf16 %v173
    %v180 = vunpack.c.h.s8.bf16 %v173
    %v181 = vunpack.c.l.s8.bf16 %v174
    %v182 = vunpack.c.h.s8.bf16 %v174
    %v183 = vunpack.c.l.s8.bf16 %v175
    %v184 = vunpack.c.h.s8.bf16 %v175
    %v185 = vunpack.c.l.s8.bf16 %v176
    %v186 = vunpack.c.h.s8.bf16 %v176
    %187 = vmatprep.subr.bf16.mxu0 0
    %188 = vmatpush1.bf16.msra.mxu0 %v179
    %189 = vmatprep.subr.bf16.mxu0 0
    %190 = vmatpush1.bf16.msra.mxu0 %v180
    %191 = vmatprep.subr.bf16.mxu0 0
    %192 = vmatpush1.bf16.msra.mxu0 %v181
    %193 = vmatprep.subr.bf16.mxu0 0
    %194 = vmatpush1.bf16.msra.mxu0 %v182
    %195 = vmatprep.subr.bf16.mxu0 0
    %196 = vmatpush1.bf16.msra.mxu0 %v183
    %197 = vmatprep.subr.bf16.mxu0 0
    %198 = vmatpush1.bf16.msra.mxu0 %v184
    %199 = vmatprep.subr.bf16.mxu0 0
    %200 = vmatpush1.bf16.msra.mxu0 %v185
    %201 = vmatprep.subr.bf16.mxu0 0
    %202 = vmatpush1.bf16.msra.mxu0 %v186
    %203 = vmatprep.subr.bf16.mxu0 0
    %204 = vmatpush1.bf16.msra.mxu0 0
    %205 = vmatprep.subr.bf16.mxu0 0
    %206 = vmatpush1.bf16.msra.mxu0 0
    %207 = vmatprep.subr.bf16.mxu0 0
    %208 = vmatpush1.bf16.msra.mxu0 0
    %209 = vmatprep.subr.bf16.mxu0 0
    %210 = vmatpush1.bf16.msra.mxu0 0
    %211 = vmatprep.subr.bf16.mxu0 0
    %212 = vmatpush1.bf16.msra.mxu0 0
    %213 = vmatprep.subr.bf16.mxu0 0
    %214 = vmatpush1.bf16.msra.mxu0 0
    %215 = vmatprep.subr.bf16.mxu0 0
    %216 = vmatpush1.bf16.msra.mxu0 0
    %217 = vmatprep.subr.bf16.mxu0 0
    %218 = vmatpush1.bf16.msra.mxu0 0
    %219 = vmatprep.mubr.bf16.mxu0 0
    %220 = vmatmul.mubr.bf16.gmra.mrb[0].mxu0 %v177
    %v221 = vpop.f32.mrb[0].mxu0
    %v222 = vadd.f32 %v31, %v221
    %v223 = vpop.f32.mrb[0].mxu0
    %v224 = vpop.f32.mrb[0].mxu0
    %v225 = vadd.f32 %v31, %v224
    %v226 = vpop.f32.mrb[0].mxu0
    %227 = vmatprep.mubr.bf16.mxu0 0
    %228 = vmatmul.mubr.bf16.gmra.mrb[0].mxu0 %v178
    %v229 = vpop.f32.mrb[0].mxu0
    %v230 = vadd.f32 %v31, %v229
    %v231 = vpop.f32.mrb[0].mxu0
    %v232 = vpop.f32.mrb[0].mxu0
    %v233 = vadd.f32 %v31, %v232
    %v234 = vpop.f32.mrb[0].mxu0
    %235 = vdwg.mxu0
    %v236 = vcvt.f32.s32.to.zero.pseudo %v222
    %v237 = vcvt.f32.s32.to.zero.pseudo %v225
    %v238 = vcvt.f32.s32.to.zero.pseudo %v230
    %v239 = vcvt.f32.s32.to.zero.pseudo %v233
    %p240 = scmp.eq.s32.totalorder 0, 0
    // Predicated region
    $region26: #{tpu_custom_call.1} parent=1 // pred_check
      %p241 = pneg %p240
    $region27: #{tpu_custom_call.1} parent=1 // pred_check_branch
      %243 = sbr.rel (%p241) target = $region29
    $region28: #{tpu_custom_call.1} parent=1 // pred_region
      %244 = vst.msk [vmem:[#allocation2] sm:$0xff] %vm32, %v236
      %245 = vst.msk [vmem:[#allocation2 + $0x8] sm:$0xff] %vm32, %v237
      %246 = vst.msk [vmem:[#allocation2 + $0x10] sm:$0xff] %vm32, %v238
      %247 = vst.msk [vmem:[#allocation2 + $0x18] sm:$0xff] %vm32, %v239
    $region29: #{tpu_custom_call.1} parent=1 // pred_fallthru
      _
    %p248 = scmp.gt.s32.totalorder 0, 0
    // Predicated region
    $region30: #{tpu_custom_call.1} parent=1 // pred_check
      %p249 = pneg %p248
    $region31: #{tpu_custom_call.1} parent=1 // pred_check_branch
      %251 = sbr.rel (%p249) target = $region33
    $region32: #{tpu_custom_call.1} parent=1 // pred_region
      %v252 = vld [vmem:[#allocation2] sm:$0xff]
      %v253 = vld [vmem:[#allocation2 + $0x8] sm:$0xff]
      %v254 = vld [vmem:[#allocation2 + $0x10] sm:$0xff]
      %v255 = vld [vmem:[#allocation2 + $0x18] sm:$0xff]
      %v256 = vadd.s32 %v252, %v236
      %v257 = vadd.s32 %v253, %v237
      %v258 = vadd.s32 %v254, %v238
      %v259 = vadd.s32 %v255, %v239
      %260 = vst.msk [vmem:[#allocation2] sm:$0xff] %vm32, %v256
      %261 = vst.msk [vmem:[#allocation2 + $0x8] sm:$0xff] %vm32, %v257
      %262 = vst.msk [vmem:[#allocation2 + $0x10] sm:$0xff] %vm32, %v258
      %263 = vst.msk [vmem:[#allocation2 + $0x18] sm:$0xff] %vm32, %v259
    $region33: #{tpu_custom_call.1} parent=1 // pred_fallthru
      _
    // Predicated region
    $region34: #{tpu_custom_call.1} parent=1 // pred_check
      %p264 = pneg %p240
    $region35: #{tpu_custom_call.1} parent=1 // pred_check_branch
      %266 = sbr.rel (%p264) target = $region37
    $region36: #{tpu_custom_call.1} parent=1 // pred_region
      %v267 = vld [vmem:[#allocation2] sm:$0xff]
      %v268 = vld [vmem:[#allocation2 + $0x8] sm:$0xff]
      %v269 = vld [vmem:[#allocation2 + $0x10] sm:$0xff]
      %v270 = vld [vmem:[#allocation2 + $0x18] sm:$0xff]
      %v271 = vcvt.s32.f32 %v267
      %v272 = vcvt.s32.f32 %v268
      %v273 = vcvt.s32.f32 %v269
      %v274 = vcvt.s32.f32 %v270
      %v275 = vmul.f32 %v271, 0.002
      %v276 = vmul.f32 %v272, 0.002
      %v277 = vmul.f32 %v273, 0.002
      %v278 = vmul.f32 %v274, 0.002
      %v279 = vld [vmem:[%s4] sm:$0x1]
      %v281 = vlaneseq
      %v282 = vshrl.u32 %v281, 7
      %v283 = vsub.s32 0, %v282
      %v284 = vrot.slane %v279, %v283
      %v286 = vadd.f32 %v275, %v284
      %v287 = vadd.f32 %v276, %v284
      %v288 = vadd.f32 %v277, %v284
      %v289 = vadd.f32 %v278, %v284
      %v290 = vld [vmem:[%s5] sm:$0xff]
      %v291 = vld [vmem:[%s5 + $0x8] sm:$0xff]
      %v292 = vld [vmem:[%s5 + $0x10] sm:$0xff]
      %v293 = vld [vmem:[%s5 + $0x18] sm:$0xff]
      %v294 = vadd.f32 %v286, %v290
      %v295 = vadd.f32 %v287, %v291
      %v296 = vadd.f32 %v288, %v292
      %v297 = vadd.f32 %v289, %v293
      %298 = vst.msk [vmem:[#allocation3] sm:$0xff] %vm32, %v294
      %299 = vst.msk [vmem:[#allocation3 + $0x8] sm:$0xff] %vm32, %v295
      %300 = vst.msk [vmem:[#allocation3 + $0x10] sm:$0xff] %vm32, %v296
      %301 = vst.msk [vmem:[#allocation3 + $0x18] sm:$0xff] %vm32, %v297
    $region37: #{tpu_custom_call.1} parent=1 // pred_fallthru
      _
    // Predicated region
    $region38: #{tpu_custom_call.1} parent=1 // pred_check
      _
    $region39: #{tpu_custom_call.1} parent=1 // pred_check_branch
      %303 = sbr.rel (0) target = $region41
    $region40: #{tpu_custom_call.1} parent=1 // pred_region
      %s305 = ssub.s32 512, 512
      %306 = vsyncadd [#allocation4], %s305
      %s307 = sshll.u32 [#allocation3], 4
      %s308 = int_to_ptr.vmem [resolvable:$true] %s307
      %313 = dma.vmem_to_hbm [thread:$0]  %s308, 512, %s6, [#allocation4], 128, 128, 8
    $region41: #{tpu_custom_call.1} parent=1 // pred_fallthru
      _
    // Predicated region
    $region42: #{tpu_custom_call.1} parent=1 // pred_check
      _
    $region43: #{tpu_custom_call.1} parent=1 // pred_check_branch
      %315 = sbr.rel (0) target = $region45
    $region44: #{tpu_custom_call.1} parent=1 // pred_region
      %316 = dma.done [#allocation4], 512
    $region45: #{tpu_custom_call.1} parent=1 // pred_fallthru
      _
    %317 = vsyncpa [#allocation4], 1

// kernel: tpu_custom_call.1
$region0: #{tpu_custom_call.1}
  #allocation0 [shape = 'u32[]', space=smem, size = 0x4, offset = 0x4, fixed_abs, tag = 'smem constant byte address 0x4 - core index']
  #allocation1 [shape = 'u32[144,128]{1,0:T(1,128)}', space=vmem, size = 0x12000, scoped, tag = 'internal scratch']
  #allocation2 [shape = 's32[32,32]{1,0:T(8,128)}', space=vmem, size = 0x4000, scoped, tag = 'scratch operand']
  %s0 = inlined_call_operand.vmem [shape: s8[32,32], index: 0, kind: input, shape index: {}]
  %s1 = inlined_call_operand.vmem [shape: s8[32,128], index: 1, kind: input, shape index: {}]
  %s2 = inlined_call_operand.vmem [shape: f32[1,128], index: 2, kind: input, shape index: {}]
  %s3 = inlined_call_operand.vmem [shape: s8[128,32], index: 3, kind: input, shape index: {}]
  %s4 = inlined_call_operand.vmem [shape: f32[1,32], index: 4, kind: input, shape index: {}]
  %s5 = inlined_call_operand.vmem [shape: f32[32,32], index: 5, kind: input, shape index: {}]
  %s6 = inlined_call_operand.hbm [shape: f32[32,32], index: 6, kind: output, shape index: {}]
  %s7 = sld [smem:[#allocation0]]
  $region46: #{tpu_custom_call.1} parent=0
    _
  %s9 = ssub.s32 1, %s7
  %s10 = scalar_select 0, %s9, %s7
  $region1: #{tpu_custom_call.1} parent=0
    #allocation3 [shape = 'u8[16384]{0}', space=vmem, size = 0x4000, scoped, tag = 'output window, operand 0, single buffered']
    #allocation4 [shape = 's32[1]{0}', space=sflag, size = 0x4, scoped, tag = 'scoped memory for tpu_custom_call.1']
    %11 = vsyncpa [#allocation4], 0
    // Predicated region
    $region2: #{tpu_custom_call.1} parent=1 // pred_check
      _
    $region3: #{tpu_custom_call.1} parent=1 // pred_check_branch
      %13 = sbr.rel (0) target = $region5
    $region4: #{tpu_custom_call.1} parent=1 // pred_region
      _
    $region5: #{tpu_custom_call.1} parent=1 // pred_fallthru
      _
    // Predicated region
    $region6: #{tpu_custom_call.1} parent=1 // pred_check
      _
    $region7: #{tpu_custom_call.1} parent=1 // pred_check_branch
      %15 = sbr.rel (0) target = $region9
    $region8: #{tpu_custom_call.1} parent=1 // pred_region
      _
    $region9: #{tpu_custom_call.1} parent=1 // pred_fallthru
      _
    // Predicated region
    $region10: #{tpu_custom_call.1} parent=1 // pred_check
      _
    $region11: #{tpu_custom_call.1} parent=1 // pred_check_branch
      %17 = sbr.rel (0) target = $region13
    $region12: #{tpu_custom_call.1} parent=1 // pred_region
      _
    $region13: #{tpu_custom_call.1} parent=1 // pred_fallthru
      _
    // Predicated region
    $region14: #{tpu_custom_call.1} parent=1 // pred_check
      _
    $region15: #{tpu_custom_call.1} parent=1 // pred_check_branch
      %19 = sbr.rel (0) target = $region17
    $region16: #{tpu_custom_call.1} parent=1 // pred_region
      _
    $region17: #{tpu_custom_call.1} parent=1 // pred_fallthru
      _
    // Predicated region
    $region18: #{tpu_custom_call.1} parent=1 // pred_check
      _
    $region19: #{tpu_custom_call.1} parent=1 // pred_check_branch
      %21 = sbr.rel (0) target = $region21
    $region20: #{tpu_custom_call.1} parent=1 // pred_region
      _
    $region21: #{tpu_custom_call.1} parent=1 // pred_fallthru
      _
    // Predicated region
    $region22: #{tpu_custom_call.1} parent=1 // pred_check
      _
    $region23: #{tpu_custom_call.1} parent=1 // pred_check_branch
      %23 = sbr.rel (0) target = $region25
    $region24: #{tpu_custom_call.1} parent=1 // pred_region
      _
    $region25: #{tpu_custom_call.1} parent=1 // pred_fallthru
      _
    %v25 = vld [vmem:[%s0] sm:$0xff]
    %v26 = vld [vmem:[%s1] sm:$0xff]
    %v27 = vunpack.c.l.s8.bf16 %v25
    %v28 = vunpack.c.h.s8.bf16 %v25
    %v29 = vunpack.c.l.s8.bf16 %v26
    %v30 = vunpack.c.h.s8.bf16 %v26
    %v31 = vcvt.s32.f32 0
    %vm32 = vcmask 261120
    %v34 = vsel %vm32, %v27, 0
    %v37 = vsel %vm32, %v28, 0
    %39 = vmatprep.subr.bf16.mxu0 0
    %40 = vmatpush1.bf16.msra.mxu0 %v29
    %41 = vmatprep.subr.bf16.mxu0 0
    %42 = vmatpush1.bf16.msra.mxu0 %v30
    %43 = vmatprep.subr.bf16.mxu0 0
    %44 = vmatpush1.bf16.msra.mxu0 0
    %45 = vmatprep.subr.bf16.mxu0 0
    %46 = vmatpush1.bf16.msra.mxu0 0
    %47 = vmatprep.subr.bf16.mxu0 0
    %48 = vmatpush1.bf16.msra.mxu0 0
    %49 = vmatprep.subr.bf16.mxu0 0
    %50 = vmatpush1.bf16.msra.mxu0 0
    %51 = vmatprep.subr.bf16.mxu0 0
    %52 = vmatpush1.bf16.msra.mxu0 0
    %53 = vmatprep.subr.bf16.mxu0 0
    %54 = vmatpush1.bf16.msra.mxu0 0
    %55 = vmatprep.subr.bf16.mxu0 0
    %56 = vmatpush1.bf16.msra.mxu0 0
    %57 = vmatprep.subr.bf16.mxu0 0
    %58 = vmatpush1.bf16.msra.mxu0 0
    %59 = vmatprep.subr.bf16.mxu0 0
    %60 = vmatpush1.bf16.msra.mxu0 0
    %61 = vmatprep.subr.bf16.mxu0 0
    %62 = vmatpush1.bf16.msra.mxu0 0
    %63 = vmatprep.subr.bf16.mxu0 0
    %64 = vmatpush1.bf16.msra.mxu0 0
    %65 = vmatprep.subr.bf16.mxu0 0
    %66 = vmatpush1.bf16.msra.mxu0 0
    %67 = vmatprep.subr.bf16.mxu0 0
    %68 = vmatpush1.bf16.msra.mxu0 0
    %69 = vmatprep.subr.bf16.mxu0 0
    %70 = vmatpush1.bf16.msra.mxu0 0
    %71 = vmatprep.mubr.bf16.mxu0 0
    %72 = vmatmul.mubr.bf16.gmra.mrb[0].mxu0 %v34
    %v73 = vpop.f32.mrb[0].mxu0
    %v74 = vadd.f32 %v31, %v73
    %v75 = vpop.f32.mrb[0].mxu0
    %v76 = vpop.f32.mrb[0].mxu0
    %v77 = vadd.f32 %v31, %v76
    %v78 = vpop.f32.mrb[0].mxu0
    %79 = vmatprep.mubr.bf16.mxu0 0
    %80 = vmatmul.mubr.bf16.gmra.mrb[0].mxu0 %v37
    %v81 = vpop.f32.mrb[0].mxu0
    %v82 = vadd.f32 %v31, %v81
    %v83 = vpop.f32.mrb[0].mxu0
    %v84 = vpop.f32.mrb[0].mxu0
    %v85 = vadd.f32 %v31, %v84
    %v86 = vpop.f32.mrb[0].mxu0
    %87 = vdwg.mxu0
    %v88 = vcvt.f32.s32.to.zero.pseudo %v74
    %v89 = vcvt.f32.s32.to.zero.pseudo %v77
    %v90 = vcvt.f32.s32.to.zero.pseudo %v82
    %v91 = vcvt.f32.s32.to.zero.pseudo %v85
    %v92 = vcvt.s32.f32 %v88
    %v93 = vcvt.s32.f32 %v89
    %v94 = vcvt.s32.f32 %v90
    %v95 = vcvt.s32.f32 %v91
    %v96 = vmul.f32 %v92, 0.004
    %v97 = vmul.f32 %v93, 0.004
    %v98 = vmul.f32 %v94, 0.004
    %v99 = vmul.f32 %v95, 0.004
    %v100 = vld [vmem:[%s2] sm:$0x1]
    %v102 = vlaneseq
    %v103 = vshrl.u32 %v102, 7
    %v104 = vsub.s32 0, %v103
    %v105 = vrot.slane %v100, %v104
    %v107 = vadd.f32 %v96, %v105
    %v108 = vadd.f32 %v97, %v105
    %v109 = vadd.f32 %v98, %v105
    %v110 = vadd.f32 %v99, %v105
    %v111 = vmul.f32 %v107, 0.5
    %v112 = vmul.f32 %v108, 0.5
    %v113 = vmul.f32 %v109, 0.5
    %v114 = vmul.f32 %v110, 0.5
    %v115 = vmul.f32 %v107, 0.044715
    %v116 = vmul.f32 %v108, 0.044715
    %v117 = vmul.f32 %v109, 0.044715
    %v118 = vmul.f32 %v110, 0.044715
    %v119 = vmul.f32 %v115, %v107
    %v120 = vmul.f32 %v116, %v108
    %v121 = vmul.f32 %v117, %v109
    %v122 = vmul.f32 %v118, %v110
    %v123 = vmul.f32 %v119, %v107
    %v124 = vmul.f32 %v120, %v108
    %v125 = vmul.f32 %v121, %v109
    %v126 = vmul.f32 %v122, %v110
    %v127 = vadd.f32 %v107, %v123
    %v128 = vadd.f32 %v108, %v124
    %v129 = vadd.f32 %v109, %v125
    %v130 = vadd.f32 %v110, %v126
    %v131 = vmul.f32 %v127, 0.7978846
    %v132 = vmul.f32 %v128, 0.7978846
    %v133 = vmul.f32 %v129, 0.7978846
    %v134 = vmul.f32 %v130, 0.7978846
    %v135 = vtanh.pop %v131
    %v136 = vtanh.pop %v132
    %v137 = vtanh.pop %v133
    %v138 = vtanh.pop %v134
    %v139 = vadd.f32 %v135, 1.0
    %v140 = vadd.f32 %v136, 1.0
    %v141 = vadd.f32 %v137, 1.0
    %v142 = vadd.f32 %v138, 1.0
    %v143 = vmul.f32 %v111, %v139
    %v144 = vmul.f32 %v112, %v140
    %v145 = vmul.f32 %v113, %v141
    %v146 = vmul.f32 %v114, %v142
    %v147 = vround.ne.pseudo %v143
    %v148 = vround.ne.pseudo %v144
    %v149 = vround.ne.pseudo %v145
    %v150 = vround.ne.pseudo %v146
    %v151 = vmax.f32 %v147, -128.0
    %v152 = vmax.f32 %v148, -128.0
    %v153 = vmax.f32 %v149, -128.0
    %v154 = vmax.f32 %v150, -128.0
    %v155 = vmin.f32 %v151, 127.0
    %v156 = vmin.f32 %v152, 127.0
    %v157 = vmin.f32 %v153, 127.0
    %v158 = vmin.f32 %v154, 127.0
    %v159 = vtrunc.f32 %v155
    %v160 = vtrunc.f32 %v156
    %v161 = vtrunc.f32 %v157
    %v162 = vtrunc.f32 %v158
    %v163 = vpack.c.f32.eXmY %v159, %v160, 312
    %v167 = vpack.c.f32.eXmY %v161, %v162, 312
    %v171 = vpack.c.b8 %v167, %v163
    %v173 = vld [vmem:[%s3] sm:$0xff]
    %v174 = vld [vmem:[%s3 + $0x8] sm:$0xff]
    %v175 = vld [vmem:[%s3 + $0x10] sm:$0xff]
    %v176 = vld [vmem:[%s3 + $0x18] sm:$0xff]
    %v177 = vunpack.c.l.s8.bf16 %v171
    %v178 = vunpack.c.h.s8.bf16 %v171
    %v179 = vunpack.c.l.s8.bf16 %v173
    %v180 = vunpack.c.h.s8.bf16 %v173
    %v181 = vunpack.c.l.s8.bf16 %v174
    %v182 = vunpack.c.h.s8.bf16 %v174
    %v183 = vunpack.c.l.s8.bf16 %v175
    %v184 = vunpack.c.h.s8.bf16 %v175
    %v185 = vunpack.c.l.s8.bf16 %v176
    %v186 = vunpack.c.h.s8.bf16 %v176
    %187 = vmatprep.subr.bf16.mxu0 0
    %188 = vmatpush1.bf16.msra.mxu0 %v179
    %189 = vmatprep.subr.bf16.mxu0 0
    %190 = vmatpush1.bf16.msra.mxu0 %v180
    %191 = vmatprep.subr.bf16.mxu0 0
    %192 = vmatpush1.bf16.msra.mxu0 %v181
    %193 = vmatprep.subr.bf16.mxu0 0
    %194 = vmatpush1.bf16.msra.mxu0 %v182
    %195 = vmatprep.subr.bf16.mxu0 0
    %196 = vmatpush1.bf16.msra.mxu0 %v183
    %197 = vmatprep.subr.bf16.mxu0 0
    %198 = vmatpush1.bf16.msra.mxu0 %v184
    %199 = vmatprep.subr.bf16.mxu0 0
    %200 = vmatpush1.bf16.msra.mxu0 %v185
    %201 = vmatprep.subr.bf16.mxu0 0
    %202 = vmatpush1.bf16.msra.mxu0 %v186
    %203 = vmatprep.subr.bf16.mxu0 0
    %204 = vmatpush1.bf16.msra.mxu0 0
    %205 = vmatprep.subr.bf16.mxu0 0
    %206 = vmatpush1.bf16.msra.mxu0 0
    %207 = vmatprep.subr.bf16.mxu0 0
    %208 = vmatpush1.bf16.msra.mxu0 0
    %209 = vmatprep.subr.bf16.mxu0 0
    %210 = vmatpush1.bf16.msra.mxu0 0
    %211 = vmatprep.subr.bf16.mxu0 0
    %212 = vmatpush1.bf16.msra.mxu0 0
    %213 = vmatprep.subr.bf16.mxu0 0
    %214 = vmatpush1.bf16.msra.mxu0 0
    %215 = vmatprep.subr.bf16.mxu0 0
    %216 = vmatpush1.bf16.msra.mxu0 0
    %217 = vmatprep.subr.bf16.mxu0 0
    %218 = vmatpush1.bf16.msra.mxu0 0
    %219 = vmatprep.mubr.bf16.mxu0 0
    %220 = vmatmul.mubr.bf16.gmra.mrb[0].mxu0 %v177
    %v221 = vpop.f32.mrb[0].mxu0
    %v222 = vadd.f32 %v31, %v221
    %v223 = vpop.f32.mrb[0].mxu0
    %v224 = vpop.f32.mrb[0].mxu0
    %v225 = vadd.f32 %v31, %v224
    %v226 = vpop.f32.mrb[0].mxu0
    %227 = vmatprep.mubr.bf16.mxu0 0
    %228 = vmatmul.mubr.bf16.gmra.mrb[0].mxu0 %v178
    %v229 = vpop.f32.mrb[0].mxu0
    %v230 = vadd.f32 %v31, %v229
    %v231 = vpop.f32.mrb[0].mxu0
    %v232 = vpop.f32.mrb[0].mxu0
    %v233 = vadd.f32 %v31, %v232
    %v234 = vpop.f32.mrb[0].mxu0
    %235 = vdwg.mxu0
    %v236 = vcvt.f32.s32.to.zero.pseudo %v222
    %v237 = vcvt.f32.s32.to.zero.pseudo %v225
    %v238 = vcvt.f32.s32.to.zero.pseudo %v230
    %v239 = vcvt.f32.s32.to.zero.pseudo %v233
    %p240 = scmp.eq.s32.totalorder 0, 0
    // Predicated region
    $region26: #{tpu_custom_call.1} parent=1 // pred_check
      %p241 = pneg %p240
    $region27: #{tpu_custom_call.1} parent=1 // pred_check_branch
      %243 = sbr.rel (%p241) target = $region29
    $region28: #{tpu_custom_call.1} parent=1 // pred_region
      %244 = vst.msk [vmem:[#allocation2] sm:$0xff] %vm32, %v236
      %245 = vst.msk [vmem:[#allocation2 + $0x8] sm:$0xff] %vm32, %v237
      %246 = vst.msk [vmem:[#allocation2 + $0x10] sm:$0xff] %vm32, %v238
      %247 = vst.msk [vmem:[#allocation2 + $0x18] sm:$0xff] %vm32, %v239
    $region29: #{tpu_custom_call.1} parent=1 // pred_fallthru
      _
    %p248 = scmp.gt.s32.totalorder 0, 0
    // Predicated region
    $region30: #{tpu_custom_call.1} parent=1 // pred_check
      %p249 = pneg %p248
    $region31: #{tpu_custom_call.1} parent=1 // pred_check_branch
      %251 = sbr.rel (%p249) target = $region33
    $region32: #{tpu_custom_call.1} parent=1 // pred_region
      %v252 = vld [vmem:[#allocation2] sm:$0xff]
      %v253 = vld [vmem:[#allocation2 + $0x8] sm:$0xff]
      %v254 = vld [vmem:[#allocation2 + $0x10] sm:$0xff]
      %v255 = vld [vmem:[#allocation2 + $0x18] sm:$0xff]
      %v256 = vadd.s32 %v252, %v236
      %v257 = vadd.s32 %v253, %v237
      %v258 = vadd.s32 %v254, %v238
      %v259 = vadd.s32 %v255, %v239
      %260 = vst.msk [vmem:[#allocation2] sm:$0xff] %vm32, %v256
      %261 = vst.msk [vmem:[#allocation2 + $0x8] sm:$0xff] %vm32, %v257
      %262 = vst.msk [vmem:[#allocation2 + $0x10] sm:$0xff] %vm32, %v258
      %263 = vst.msk [vmem:[#allocation2 + $0x18] sm:$0xff] %vm32, %v259
    $region33: #{tpu_custom_call.1} parent=1 // pred_fallthru
      _
    // Predicated region
    $region34: #{tpu_custom_call.1} parent=1 // pred_check
      %p264 = pneg %p240
    $region35: #{tpu_custom_call.1} parent=1 // pred_check_branch
      %266 = sbr.rel (%p264) target = $region37
    $region36: #{tpu_custom_call.1} parent=1 // pred_region
      %v267 = vld [vmem:[#allocation2] sm:$0xff]
      %v268 = vld [vmem:[#allocation2 + $0x8] sm:$0xff]
      %v269 = vld [vmem:[#allocation2 + $0x10] sm:$0xff]
      %v270 = vld [vmem:[#allocation2 + $0x18] sm:$0xff]
      %v271 = vcvt.s32.f32 %v267
      %v272 = vcvt.s32.f32 %v268
      %v273 = vcvt.s32.f32 %v269
      %v274 = vcvt.s32.f32 %v270
      %v275 = vmul.f32 %v271, 0.002
      %v276 = vmul.f32 %v272, 0.002
      %v277 = vmul.f32 %v273, 0.002
      %v278 = vmul.f32 %v274, 0.002
      %v279 = vld [vmem:[%s4] sm:$0x1]
      %v281 = vlaneseq
      %v282 = vshrl.u32 %v281, 7
      %v283 = vsub.s32 0, %v282
      %v284 = vrot.slane %v279, %v283
      %v286 = vadd.f32 %v275, %v284
      %v287 = vadd.f32 %v276, %v284
      %v288 = vadd.f32 %v277, %v284
      %v289 = vadd.f32 %v278, %v284
      %v290 = vld [vmem:[%s5] sm:$0xff]
      %v291 = vld [vmem:[%s5 + $0x8] sm:$0xff]
      %v292 = vld [vmem:[%s5 + $0x10] sm:$0xff]
      %v293 = vld [vmem:[%s5 + $0x18] sm:$0xff]
      %v294 = vadd.f32 %v286, %v290
      %v295 = vadd.f32 %v287, %v291
      %v296 = vadd.f32 %v288, %v292
      %v297 = vadd.f32 %v289, %v293
      %298 = vst.msk [vmem:[#allocation3] sm:$0xff] %vm32, %v294
      %299 = vst.msk [vmem:[#allocation3 + $0x8] sm:$0xff] %vm32, %v295
      %300 = vst.msk [vmem:[#allocation3 + $0x10] sm:$0xff] %vm32, %v296
      %301 = vst.msk [vmem:[#allocation3 + $0x18] sm:$0xff] %vm32, %v297
    $region37: #{tpu_custom_call.1} parent=1 // pred_fallthru
      _
    // Predicated region
    $region38: #{tpu_custom_call.1} parent=1 // pred_check
      _
    $region39: #{tpu_custom_call.1} parent=1 // pred_check_branch
      %303 = sbr.rel (0) target = $region41
    $region40: #{tpu_custom_call.1} parent=1 // pred_region
      %s305 = ssub.s32 512, 512
      %306 = vsyncadd [#allocation4], %s305
      %s307 = sshll.u32 [#allocation3], 4
      %s308 = int_to_ptr.vmem [resolvable:$true] %s307
      %313 = dma.vmem_to_hbm [thread:$0]  %s308, 512, %s6, [#allocation4], 128, 128, 8
    $region41: #{tpu_custom_call.1} parent=1 // pred_fallthru
      _
    // Predicated region
    $region42: #{tpu_custom_call.1} parent=1 // pred_check
      _
    $region43: #{tpu_custom_call.1} parent=1 // pred_check_branch
      %315 = sbr.rel (0) target = $region45
    $region44: #{tpu_custom_call.1} parent=1 // pred_region
      %316 = dma.done [#allocation4], 512
    $region45: #{tpu_custom_call.1} parent=1 // pred_fallthru
      _
    %317 = vsyncpa [#allocation4], 1

</llo_original>
